<compile_context>
chip_gen: v5e
topology: v5e:2x2
jax: 0.10.0
libtpu: 0.0.40
codegen_flags: <defaults>
</compile_context>

<pallas_src>
import jax
import jax.numpy as jnp
from jax.experimental import pallas as pl
from jax.experimental.pallas import tpu as pltpu


def _budgets():
    """Return (per-block byte budget, vmem_limit_bytes), generation-aware."""
    try:
        vmem_cap = int(pltpu.get_tpu_info().vmem_capacity_bytes)
    except Exception:
        vmem_cap = 128 * 1024 * 1024  # assume v5e/v6e-class physical VMEM
    if vmem_cap <= 64 * 1024 * 1024:
        # v7x-class: 64 MiB physical VMEM, very high HBM BW -> fat blocks but
        # keep 2x-buffered input + output comfortably under 48 MiB.
        return 8 * 1024 * 1024, 48 * 1024 * 1024
    # v5e/v6e: 128 MiB physical VMEM.
    return 16 * 1024 * 1024, 64 * 1024 * 1024


def _sum_channels_kernel(x_ref, o_ref):
    # x_ref: (Bt, C, L) block; o_ref: (Bt, 1, L) block.
    # Let the reduction carry the f32 accumulation dtype (no full-block upcast).
    o_ref[...] = jnp.sum(
        x_ref[...], axis=1, keepdims=True, dtype=jnp.float32
    ).astype(o_ref.dtype)


def _make_csplit_kernel(c_total, ct):
    """Kernel with a C-reduction grid axis (axis 1), f32 accumulator scratch."""
    ragged = (c_total % ct) != 0

    def kernel(x_ref, o_ref, acc_ref):
        c = pl.program_id(1)

        @pl.when(c == 0)
        def _():
            acc_ref[...] = jnp.zeros_like(acc_ref)

        x = x_ref[...]
        if ragged:
            # Mask padding rows of the last (partial) channel chunk.
            row = jax.lax.broadcasted_iota(jnp.int32, x.shape, 1)
            x = jnp.where(row < (c_total - c * ct), x, jnp.zeros_like(x))
        acc_ref[...] += jnp.sum(x, axis=1, keepdims=True, dtype=jnp.float32)

        @pl.when(c == pl.num_programs(1) - 1)
        def _():
            o_ref[...] = acc_ref[...].astype(o_ref.dtype)

    return kernel


def torch_model_forward(x):
    """Equivalent of TorchModel.forward: torch.unsqueeze(x, 2).sum(1)."""
    B, C, H, W = x.shape
    HW = H * W
    itemsize = jnp.dtype(x.dtype).itemsize
    budget, vmem_limit = _budgets()

    # Lane-dense layout: last (lane) dim is H*W.
    x2 = x.reshape(B, C, HW)
    out_shape = jax.ShapeDtypeStruct((B, 1, HW), x.dtype)

    row_bytes = C * HW * itemsize

    if row_bytes <= budget:
        # Fold several batch rows into one fully-contiguous (Bt, C, HW) block:
        # one large DMA per grid step, single flat parallel grid axis.
        bt = min(B, max(1, budget // row_bytes))
        grid = (pl.cdiv(B, bt),)
        out = pl.pallas_call(
            _sum_channels_kernel,
            out_shape=out_shape,
            grid_spec=pltpu.PrefetchScalarGridSpec(
                num_scalar_prefetch=0,
                grid=grid,
                in_specs=[pl.BlockSpec((bt, C, HW), lambda i: (i, 0, 0))],
                out_specs=pl.BlockSpec((bt, 1, HW), lambda i: (i, 0, 0)),
            ),
            compiler_params=pltpu.CompilerParams(
                dimension_semantics=("parallel",),
                vmem_limit_bytes=vmem_limit,
            ),
        )(x2)
        return out.reshape(B, 1, H, W)

    # One (C, HW) row exceeds the budget: tile the spatial (lane) axis.
    if HW >= 128:
        tile_budget = (budget // (C * itemsize)) // 128 * 128
        if tile_budget >= 128:
            tile = min(tile_budget, (HW // 128) * 128)
            ct = C  # full-C blocks fit
        else:
            tile = 128
            ct = None  # C itself must be split
    else:
        tile = HW  # full-extent lane block (< 128 lanes)
        ct = None  # row_bytes > budget with tiny HW => C must be split

    n_sp = pl.cdiv(HW, tile)

    if ct == C:
        # Spatial tiling only; flat parallel axis over (batch, spatial tile).
        grid = (B * n_sp,)
        out = pl.pallas_call(
            _sum_channels_kernel,
            out_shape=out_shape,
            grid_spec=pltpu.PrefetchScalarGridSpec(
                num_scalar_prefetch=0,
                grid=grid,
                in_specs=[pl.BlockSpec(
                    (1, C, tile), lambda i: (i // n_sp, 0, i % n_sp))],
                out_specs=pl.BlockSpec(
                    (1, 1, tile), lambda i: (i // n_sp, 0, i % n_sp)),
            ),
            compiler_params=pltpu.CompilerParams(
                dimension_semantics=("parallel",),
                vmem_limit_bytes=vmem_limit,
            ),
        )(x2)
        return out.reshape(B, 1, H, W)

    # Very large C: split the channel axis as a reduction grid axis.
    ct = max(32, (budget // (tile * itemsize)) // 32 * 32)
    ct = min(ct, C)
    nc = pl.cdiv(C, ct)
    grid = (B * n_sp, nc)
    out = pl.pallas_call(
        _make_csplit_kernel(C, ct),
        out_shape=out_shape,
        grid_spec=pltpu.PrefetchScalarGridSpec(
            num_scalar_prefetch=0,
            grid=grid,
            in_specs=[pl.BlockSpec(
                (1, ct, tile), lambda i, c: (i // n_sp, c, i % n_sp))],
            out_specs=pl.BlockSpec(
                (1, 1, tile), lambda i, c: (i // n_sp, 0, i % n_sp)),
            scratch_shapes=[pltpu.VMEM((1, 1, tile), jnp.float32)],
        ),
        compiler_params=pltpu.CompilerParams(
            dimension_semantics=("parallel", "arbitrary"),
            vmem_limit_bytes=vmem_limit,
        ),
    )(x2)
    return out.reshape(B, 1, H, W)


if __name__ == "__main__":
    key = jax.random.PRNGKey(0)
    B, C, H, W = 2, 4, 16, 16
    x = jax.random.normal(key, (B, C, H, W), dtype=jnp.float32)

    out = torch_model_forward(x)
    out = jax.block_until_ready(out)

    # Reference (plain JAX): unsqueeze at dim 2 then sum over dim 1.
    ref = jnp.sum(jnp.expand_dims(x, 2), axis=1)
    assert out.shape == ref.shape == (B, 1, H, W), (out.shape, ref.shape)
    assert jnp.allclose(out, ref, atol=1e-6, rtol=1e-6)

    print("KERNEL_OK")
</pallas_src>

<mosaic_0001>
module attributes {stable_mosaic.version = 11 : i64} {
  func.func @_sum_channels_kernel(%arg0: i32, %arg1: memref<2x4x256xf32, #tpu.memory_space<vmem>>, %arg2: memref<2x1x256xf32, #tpu.memory_space<vmem>>) attributes {dimension_semantics = [#tpu.dimension_semantics<parallel>], iteration_bounds = array<i64: 1>, scalar_prefetch = 0 : i64, scratch_operands = 0 : i64, tpu.core_type = #tpu.core_type<tc>, window_params = [{transform_indices = @transform_0, window_bounds = array<i64: 2, 4, 256>}, {transform_indices = @transform_1, window_bounds = array<i64: 2, 1, 256>}]} {
    %c0 = arith.constant 0 : index
    %c0_0 = arith.constant 0 : index
    %c0_1 = arith.constant 0 : index
    %0 = vector.load %arg1[%c0, %c0_0, %c0_1] : memref<2x4x256xf32, #tpu.memory_space<vmem>>, vector<2x4x256xf32>
    %cst = arith.constant dense<0.000000e+00> : vector<2x256xf32>
    %1 = vector.multi_reduction <add>, %0, %cst [1] : vector<2x4x256xf32> to vector<2x256xf32>
    %2 = vector.shape_cast %1 : vector<2x256xf32> to vector<2x1x256xf32>
    %c0_2 = arith.constant 0 : index
    %c0_3 = arith.constant 0 : index
    %c0_4 = arith.constant 0 : index
    %3 = vector.load %arg2[%c0_2, %c0_3, %c0_4] : memref<2x1x256xf32, #tpu.memory_space<vmem>>, vector<2x1x256xf32>
    tpu.vector_store %arg2[%c0_2, %c0_3, %c0_4], %2 {strides = array<i32>} : memref<2x1x256xf32, #tpu.memory_space<vmem>>, vector<2x1x256xf32>,
    return
  }
  func.func @transform_0(%arg0: i32) -> (i32, i32, i32) {
    %c0_i32 = arith.constant 0 : i32
    %c0_i32_0 = arith.constant 0 : i32
    %c0_i32_1 = arith.constant 0 : i32
    return %arg0, %c0_i32, %c0_i32_0 : i32, i32, i32
  }
  func.func @transform_1(%arg0: i32) -> (i32, i32, i32) {
    %c0_i32 = arith.constant 0 : i32
    %c0_i32_0 = arith.constant 0 : i32
    %c0_i32_1 = arith.constant 0 : i32
    return %arg0, %c0_i32, %c0_i32_0 : i32, i32, i32
  }
}

</mosaic_0001>

<llo_original>
// kernel: tpu_custom_call.1
$region0: #{tpu_custom_call.1}
  #allocation0 [shape = 'u32[]', space=smem, size = 0x4, offset = 0x4, fixed_abs, tag = 'smem constant byte address 0x4 - core index']
  #allocation1 [shape = 'u32[72,128]{1,0:T(1,128)}', space=vmem, size = 0x9000, scoped, tag = 'internal scratch']
  %s0 = inlined_call_operand.hbm [shape: f32[2,4,256], index: 0, kind: input, shape index: {}]
  %s1 = inlined_call_operand.hbm [shape: f32[2,1,256], index: 1, kind: output, shape index: {}]
  %s2 = sld [smem:[#allocation0]]
  $region18: #{tpu_custom_call.1} parent=0
    _
  %s4 = ssub.s32 1, %s2
  %s5 = scalar_select 0, %s4, %s2
  $region1: #{tpu_custom_call.1} parent=0
    #allocation2 [shape = 'u8[8192]{0}', space=vmem, size = 0x2000, scoped, tag = 'input window, operand 0, single buffered']
    #allocation3 [shape = 's32[1]{0}', space=sflag, size = 0x4, scoped, tag = 'scoped memory for tpu_custom_call.1']
    #allocation4 [shape = 's32[1]{0}', space=sflag, size = 0x4, scoped, tag = 'scoped memory for tpu_custom_call.1']
    #allocation5 [shape = 'u8[2048]{0}', space=vmem, size = 0x800, scoped, tag = 'output window, operand 0, single buffered']
    %6 = vsyncpa [#allocation3], 0
    %7 = vsyncpa [#allocation4], 0
    // Predicated region
    $region2: #{tpu_custom_call.1} parent=1 // pred_check
      _
    $region3: #{tpu_custom_call.1} parent=1 // pred_check_branch
      %9 = sbr.rel (0) target = $region5
    $region4: #{tpu_custom_call.1} parent=1 // pred_region
      %11 = vsyncadd [#allocation3], 0
      %s12 = sshll.u32 %s0, 4
      %s13 = int_to_ptr.hbm [resolvable:$true] %s12
      %s14 = sshll.u32 [#allocation2], 4
      %s15 = int_to_ptr.vmem [resolvable:$true] %s14
      %20 = dma.hbm_to_vmem [thread:$0]  %s13, 256, %s15, [#allocation3], 128, 128, 8
    $region5: #{tpu_custom_call.1} parent=1 // pred_fallthru
      _
    // Predicated region
    $region6: #{tpu_custom_call.1} parent=1 // pred_check
      _
    $region7: #{tpu_custom_call.1} parent=1 // pred_check_branch
      %22 = sbr.rel (0) target = $region9
    $region8: #{tpu_custom_call.1} parent=1 // pred_region
      %24 = dma.done [#allocation3], 256
    $region9: #{tpu_custom_call.1} parent=1 // pred_fallthru
      _
    %v25 = vld [vmem:[#allocation2] sm:$0xff]
    %v26 = vld [vmem:[#allocation2 + $0x8] sm:$0xff]
    %29 = vst [vmem:[#allocation1] ss:$2 sm:$0xff] %v25
    %v30 = vld.sshfl [vmem:[#allocation1] sm:$0xff pattern:$0x75316420]
    %v31 = vld.sshfl [vmem:[#allocation1 + $0x8] sm:$0xff pattern:$0x75316420]
    %s32 = scalar_lea.vmem [#allocation1], 16
    %33 = vst [vmem:[%s32] ss:$2 sm:$0xff] %v26
    %v34 = vld.sshfl [vmem:[#allocation1 + $0x10] sm:$0xff pattern:$0x75316420]
    %v35 = vld.sshfl [vmem:[#allocation1 + $0x18] sm:$0xff pattern:$0x75316420]
    %vm40 = vcmask 1043456
    %v41 = vsel %vm40, %v30, 0.0
    %v42 = vrot.slane %v41, 4
    %v43 = vadd.f32 %v41, %v42
    %v44 = vrot.slane %v43, 2
    %v45 = vadd.f32 %v43, %v44
    %v46 = vrot.slane %v45, 1
    %v47 = vadd.f32 %v45, %v46
    %v48 = vsel %vm40, %v31, 0.0
    %v49 = vrot.slane %v48, 4
    %v50 = vadd.f32 %v48, %v49
    %v51 = vrot.slane %v50, 2
    %v52 = vadd.f32 %v50, %v51
    %v53 = vrot.slane %v52, 1
    %v54 = vadd.f32 %v52, %v53
    %v55 = vsel %vm40, %v34, 0.0
    %v56 = vrot.slane %v55, 4
    %v57 = vadd.f32 %v55, %v56
    %v58 = vrot.slane %v57, 2
    %v59 = vadd.f32 %v57, %v58
    %v60 = vrot.slane %v59, 1
    %v61 = vadd.f32 %v59, %v60
    %v62 = vsel %vm40, %v35, 0.0
    %v63 = vrot.slane %v62, 4
    %v64 = vadd.f32 %v62, %v63
    %v65 = vrot.slane %v64, 2
    %v66 = vadd.f32 %v64, %v65
    %v67 = vrot.slane %v66, 1
    %v68 = vadd.f32 %v66, %v67
    %v73 = vrot.slane %v54, 7
    %v74 = vrot.slane %v68, 7
    %vm75 = vcmask 1040384
    %v76 = vsel %vm75, %v47, %v73
    %v77 = vsel %vm75, %v61, %v74
    %v80 = vlaneseq
    %vm81 = vcmp.ge.s32.totalorder %v80, 0
    %vm82 = vcmp.lt.s32.totalorder %v80, 256
    %vm83 = vmand %vm81, %vm82
    %84 = vst.msk [vmem:[#allocation5] sm:$0x3] %vm83, %v76
    %85 = vst.msk [vmem:[#allocation5 + $0x2] sm:$0x3] %vm83, %v77
    // Predicated region
    $region10: #{tpu_custom_call.1} parent=1 // pred_check
      _
    $region11: #{tpu_custom_call.1} parent=1 // pred_check_branch
      %87 = sbr.rel (0) target = $region13
    $region12: #{tpu_custom_call.1} parent=1 // pred_region
      %89 = vsyncadd [#allocation4], 0
      %s90 = sshll.u32 [#allocation5], 4
      %s91 = int_to_ptr.vmem [resolvable:$true] %s90
      %s92 = sshll.u32 %s1, 4
      %s93 = int_to_ptr.hbm [resolvable:$true] %s92
      %98 = dma.vmem_to_hbm [thread:$0]  %s91, 64, %s93, [#allocation4], 32, 32, 2
    $region13: #{tpu_custom_call.1} parent=1 // pred_fallthru
      _
    // Predicated region
    $region14: #{tpu_custom_call.1} parent=1 // pred_check
      _
    $region15: #{tpu_custom_call.1} parent=1 // pred_check_branch
      %100 = sbr.rel (0) target = $region17
    $region16: #{tpu_custom_call.1} parent=1 // pred_region
      %102 = dma.done [#allocation4], 64
    $region17: #{tpu_custom_call.1} parent=1 // pred_fallthru
      _
    %103 = vsyncpa [#allocation3], 1
    %104 = vsyncpa [#allocation4], 1

</llo_original>
